<compile_context>
chip_gen: v7x
topology: tpu7x:2x2x1
jax: 0.10.0
libtpu: 0.0.40
codegen_flags: <defaults>
</compile_context>

<pallas_src>
import math
import functools

import jax
import jax.numpy as jnp
from jax import lax
from jax.experimental import pallas as pl
from jax.experimental.pallas import tpu as pltpu


_LANE = 128


def _round_up(x, m):
    return ((x + m - 1) // m) * m


def _sublane_multiple(dtype):
    # Packed sublane multiple: f32 -> 8, bf16/f16 -> 16, int8/fp8 -> 32.
    return 8 * max(1, 4 // jnp.dtype(dtype).itemsize)


def _fused_proj_gelu_ln_kernel(fid_ref, x_ref, w_ref, aux_ref, o_ref, *, inv_p):
    # fid_ref: scalar-prefetch (n_tiles,) feature-id table (used by index_maps only)
    # x_ref: (TN, Dp)  activations, native dtype
    # w_ref: (1, Dp, Pp) weight, cast to activation dtype
    # aux_ref: (1, 3, Pp) f32 rows = [bias, gamma, beta]
    # o_ref: (TN, Pp)
    del fid_ref
    x = x_ref[...]
    w = w_ref[0]
    aux = aux_ref[0]                         # (3, Pp) f32

    # Linear on the MXU, f32 accumulation, same-dtype operands.
    y = jnp.dot(x, w, preferred_element_type=jnp.float32) + aux[0]

    # Exact GELU (torch.nn.GELU default: 0.5*x*(1+erf(x/sqrt(2)))).
    # Padded P lanes have zero weight columns and zero bias -> stay exactly 0.
    y = 0.5 * y * (1.0 + lax.erf(y * (1.0 / math.sqrt(2.0))))

    # LayerNorm over the real P lanes via two independent reductions; padded
    # lanes contribute exactly 0 to both sums so no masking is required.
    mean = jnp.sum(y, axis=-1, keepdims=True) * inv_p
    sumsq = jnp.sum(y * y, axis=-1, keepdims=True) * inv_p
    var = jnp.maximum(sumsq - mean * mean, 0.0)
    inv_std = lax.rsqrt(var + 1e-5)

    scale = inv_std * aux[1]                 # (TN, Pp)
    shift = aux[2] - mean * scale            # (TN, Pp)
    o_ref[...] = (y * scale + shift).astype(o_ref.dtype)


def feature_projection(features, params, *, max_row_block=None,
                       vmem_budget_bytes=None):
    """Fused forward pass: per-feature Linear->GELU->LayerNorm, concat on axis 0."""
    keys = list(features.keys())
    nf = len(keys)
    gamma = params["ln_gamma"]
    beta = params["ln_beta"]
    p = int(gamma.shape[0])

    ns = [int(features[k].shape[0]) for k in keys]
    ds = [int(features[k].shape[1]) for k in keys]

    x_dtype = jnp.result_type(*[features[k].dtype for k in keys])
    out_dtype = x_dtype
    xi = jnp.dtype(x_dtype).itemsize
    sub = _sublane_multiple(x_dtype)

    # ---- generation-aware VMEM accounting -------------------------------
    try:
        vmem_cap = int(pltpu.get_tpu_info().vmem_capacity_bytes)
    except Exception:  # no TPU info available: assume the tightest gen (v7x)
        vmem_cap = 64 << 20
    if vmem_budget_bytes is None:
        # ~32 MiB on a 64 MiB/TC part, ~90 MiB on a 128 MiB part.
        vmem_budget_bytes = max(16 << 20,
                                min(int(0.7 * vmem_cap), vmem_cap - (32 << 20)))
    if max_row_block is None:
        max_row_block = 1024 if vmem_cap >= (100 << 20) else 512

    d_pad = _round_up(max(ds), sub)          # shared K dim (zero-padded)
    p_pad = _round_up(p, _LANE)              # lane-dense output width
    d_lane = _round_up(d_pad, _LANE)         # real lane footprint of the x tile

    def _vmem_est(rb):
        x_t = rb * d_lane * xi
        w_t = d_pad * p_pad * xi
        o_t = rb * p_pad * xi
        aux_t = 8 * p_pad * 4                # (3, Pp) pads to 8 sublanes
        return 2 * (x_t + w_t + o_t + aux_t)  # double-buffered operands

    row_block = max(sub, min(max_row_block, _round_up(max(ns), sub)))
    while row_block > sub and _vmem_est(row_block) > vmem_budget_bytes:
        row_block = max(sub, _round_up(row_block // 2, sub))
    # TODO(synk): if the double-buffered (d_pad, p_pad) weight alone exceeds the
    # budget (very large D/P), add a K grid axis with an f32 accumulator or a
    # P-column axis with two-pass LayerNorm instead of only shrinking row_block.

    # Per-feature row padding to a multiple of row_block; tiles are contiguous
    # in one flat (total_pad, d_pad) array so grid step t <-> row tile t.
    n_pads = [_round_up(n, row_block) for n in ns]
    offs = [0]
    for npk in n_pads:
        offs.append(offs[-1] + npk)
    total_pad = offs[-1]
    n_tiles = total_pad // row_block

    # Flat padded activations (skip copies when nothing needs padding).
    xs = []
    for k, nk, dk, npk in zip(keys, ns, ds, n_pads):
        x = features[k].astype(x_dtype)
        if nk != npk or dk != d_pad:
            x = jnp.pad(x, ((0, npk - nk), (0, d_pad - dk)))
        xs.append(x)
    x_cat = xs[0] if nf == 1 else jnp.concatenate(xs, axis=0)

    # Stacked per-feature weights (cast to x_dtype for a same-dtype MXU matmul)
    # and one merged f32 auxiliary [bias; gamma; beta] per feature.
    g_row = jnp.pad(gamma.astype(jnp.float32), (0, p_pad - p))
    b_row = jnp.pad(beta.astype(jnp.float32), (0, p_pad - p))
    ws, auxs = [], []
    for k, dk in zip(keys, ds):
        w, b = params["projection"][k]
        ws.append(jnp.pad(w.astype(x_dtype), ((0, d_pad - dk), (0, p_pad - p))))
        bias_row = jnp.pad(b.astype(jnp.float32), (0, p_pad - p))
        auxs.append(jnp.stack([bias_row, g_row, b_row]))
    w_stk = jnp.stack(ws)                    # (F, d_pad, p_pad)
    aux_stk = jnp.stack(auxs)                # (F, 3, p_pad)

    # Scalar-prefetched per-tile feature id -> data-dependent weight/aux fetch.
    fid_list = []
    for f, npk in enumerate(n_pads):
        fid_list.extend([f] * (npk // row_block))
    feat_ids = jnp.asarray(fid_list, dtype=jnp.int32)

    kernel = functools.partial(_fused_proj_gelu_ln_kernel, inv_p=1.0 / p)

    est = _vmem_est(row_block)
    vmem_limit = int(min(max(int(1.25 * est), 20 << 20), vmem_cap - (8 << 20)))

    cost = pl.CostEstimate(
        flops=2 * total_pad * d_pad * p_pad + 12 * total_pad * p_pad,
        transcendentals=total_pad * p_pad + total_pad,
        bytes_accessed=(x_cat.size * xi + w_stk.size * xi
                        + aux_stk.size * 4 + total_pad * p_pad * xi),
    )

    out = pl.pallas_call(
        kernel,
        out_shape=jax.ShapeDtypeStruct((total_pad, p_pad), out_dtype),
        grid_spec=pltpu.PrefetchScalarGridSpec(
            num_scalar_prefetch=1,
            grid=(n_tiles,),
            in_specs=[
                pl.BlockSpec((row_block, d_pad), lambda t, fid: (t, 0)),       # x
                pl.BlockSpec((1, d_pad, p_pad), lambda t, fid: (fid[t], 0, 0)),  # W
                pl.BlockSpec((1, 3, p_pad), lambda t, fid: (fid[t], 0, 0)),    # aux
            ],
            out_specs=pl.BlockSpec((row_block, p_pad), lambda t, fid: (t, 0)),
        ),
        compiler_params=pltpu.CompilerParams(
            dimension_semantics=("parallel",),
            vmem_limit_bytes=vmem_limit,
        ),
        cost_estimate=cost,
    )(feat_ids, x_cat, w_stk, aux_stk)

    # Strip padding.  Fast path: no row padding -> rows already in concat order.
    if total_pad == sum(ns):
        return out[:, :p] if p_pad != p else out
    pieces = [out[offs[f]:offs[f] + nk, :p] for f, nk in enumerate(ns)]
    return pieces[0] if nf == 1 else jnp.concatenate(pieces, axis=0)


def init_params(feature_dims, projection_dim, key):
    """Deterministic parameter init. One Linear per feature key + shared LayerNorm."""
    params = {"projection": {},
              "ln_gamma": jnp.ones((projection_dim,), jnp.float32),
              "ln_beta": jnp.zeros((projection_dim,), jnp.float32)}
    for k, d in sorted(feature_dims.items()):
        key, kw, kb = jax.random.split(key, 3)
        # torch Linear default init: U(-1/sqrt(fan_in), 1/sqrt(fan_in)),
        # weight stored as [D, P] (transposed vs torch's [P, D]).
        bound = 1.0 / math.sqrt(d)
        w = jax.random.uniform(kw, (d, projection_dim), jnp.float32, -bound, bound)
        b = jax.random.uniform(kb, (projection_dim,), jnp.float32, -bound, bound)
        params["projection"][k] = (w, b)
    return params


if __name__ == "__main__":
    projection_dim = 32
    feature_dims = {"audio": 16, "video": 24}
    batch = 8

    key = jax.random.PRNGKey(0)
    key, k1, k2, kp = jax.random.split(key, 4)
    features = {
        "audio": jax.random.normal(k1, (batch, feature_dims["audio"]), jnp.float32),
        "video": jax.random.normal(k2, (batch, feature_dims["video"]), jnp.float32),
    }
    params = init_params(feature_dims, projection_dim, kp)

    out = feature_projection(features, params)
    out = jax.block_until_ready(out)

    # Pure-JAX reference check (torch-style centered LayerNorm).
    def ref_one(x, w, b, g, bt):
        y = x @ w + b
        y = 0.5 * y * (1.0 + lax.erf(y / math.sqrt(2.0)))
        mean = y.mean(-1, keepdims=True)
        var = ((y - mean) ** 2).mean(-1, keepdims=True)
        return (y - mean) / jnp.sqrt(var + 1e-5) * g + bt

    ref = jnp.concatenate(
        [ref_one(features[k], *params["projection"][k],
                 params["ln_gamma"], params["ln_beta"])
         for k in features], axis=0)

    assert out.shape == (2 * batch, projection_dim), out.shape
    err = float(jnp.max(jnp.abs(out - ref)))
    assert jnp.allclose(out, ref, atol=1e-4, rtol=1e-4), err
    print("KERNEL_OK")
</pallas_src>

<mosaic_0001>
module attributes {stable_mosaic.version = 11 : i64} {
  func.func @_fused_proj_gelu_ln_kernel(%arg0: i32, %arg1: memref<2xi32, #tpu.memory_space<smem>>, %arg2: memref<8x24xf32, #tpu.memory_space<vmem>>, %arg3: memref<1x24x128xf32, #tpu.memory_space<vmem>>, %arg4: memref<1x3x128xf32, #tpu.memory_space<vmem>>, %arg5: memref<8x128xf32, #tpu.memory_space<vmem>>) attributes {dimension_semantics = [#tpu.dimension_semantics<parallel>], iteration_bounds = array<i64: 2>, scalar_prefetch = 1 : i64, scratch_operands = 0 : i64, tpu.core_type = #tpu.core_type<tc>, window_params = [{transform_indices = @transform_0, window_bounds = array<i64: 8, 24>}, {transform_indices = @transform_1, window_bounds = array<i64: 1, 24, 128>}, {transform_indices = @transform_2, window_bounds = array<i64: 1, 3, 128>}, {transform_indices = @transform_3, window_bounds = array<i64: 8, 128>}]} {
    %c0 = arith.constant 0 : index
    %c0_0 = arith.constant 0 : index
    %0 = vector.load %arg2[%c0, %c0_0] : memref<8x24xf32, #tpu.memory_space<vmem>>, vector<8x24xf32>
    %c0_1 = arith.constant 0 : index
    %c0_2 = arith.constant 0 : index
    %c0_3 = arith.constant 0 : index
    %1 = vector.load %arg3[%c0_1, %c0_2, %c0_3] : memref<1x24x128xf32, #tpu.memory_space<vmem>>, vector<1x24x128xf32>
    %2 = vector.shape_cast %1 : vector<1x24x128xf32> to vector<24x128xf32>
    %c0_4 = arith.constant 0 : index
    %c0_5 = arith.constant 0 : index
    %c0_6 = arith.constant 0 : index
    %3 = vector.load %arg4[%c0_4, %c0_5, %c0_6] : memref<1x3x128xf32, #tpu.memory_space<vmem>>, vector<1x3x128xf32>
    %4 = vector.shape_cast %3 : vector<1x3x128xf32> to vector<3x128xf32>
    %cst = arith.constant dense<0.000000e+00> : vector<8x128xf32>
    %5 = tpu.matmul %0, %2, %cst {dimension_numbers = #tpu.dot_dimension_numbers<[1], [0], [0], [1], [0, 0, 1, 1], [], []>} : vector<8x24xf32>, vector<24x128xf32>, vector<8x128xf32> -> vector<8x128xf32>
    %6 = vector.extract_strided_slice %4 {offsets = [0, 0], sizes = [1, 128], strides = [1, 1]} : vector<3x128xf32> to vector<1x128xf32>
    %7 = vector.shape_cast %6 : vector<1x128xf32> to vector<128xf32>
    %8 = vector.shape_cast %7 : vector<128xf32> to vector<1x128xf32>
    %9 = vector.broadcast %8 : vector<1x128xf32> to vector<8x128xf32>
    %10 = arith.addf %5, %9 : vector<8x128xf32>
    %cst_7 = arith.constant 5.000000e-01 : f32
    %11 = vector.broadcast %cst_7 : f32 to vector<8x128xf32>
    %12 = arith.mulf %11, %10 : vector<8x128xf32>
    %cst_8 = arith.constant 0.707106769 : f32
    %13 = vector.broadcast %cst_8 : f32 to vector<8x128xf32>
    %14 = arith.mulf %10, %13 : vector<8x128xf32>
    %15 = math.erf %14 : vector<8x128xf32>
    %cst_9 = arith.constant 1.000000e+00 : f32
    %16 = vector.broadcast %cst_9 : f32 to vector<8x128xf32>
    %17 = arith.addf %16, %15 : vector<8x128xf32>
    %18 = arith.mulf %12, %17 : vector<8x128xf32>
    %cst_10 = arith.constant dense<0.000000e+00> : vector<8xf32>
    %19 = vector.multi_reduction <add>, %18, %cst_10 [1] : vector<8x128xf32> to vector<8xf32>
    %20 = vector.shape_cast %19 : vector<8xf32> to vector<8x1xf32>
    %cst_11 = arith.constant 3.125000e-02 : f32
    %21 = vector.broadcast %cst_11 : f32 to vector<8x1xf32>
    %22 = arith.mulf %20, %21 : vector<8x1xf32>
    %23 = arith.mulf %18, %18 : vector<8x128xf32>
    %cst_12 = arith.constant dense<0.000000e+00> : vector<8xf32>
    %24 = vector.multi_reduction <add>, %23, %cst_12 [1] : vector<8x128xf32> to vector<8xf32>
    %25 = vector.shape_cast %24 : vector<8xf32> to vector<8x1xf32>
    %cst_13 = arith.constant 3.125000e-02 : f32
    %26 = vector.broadcast %cst_13 : f32 to vector<8x1xf32>
    %27 = arith.mulf %25, %26 : vector<8x1xf32>
    %28 = arith.mulf %22, %22 : vector<8x1xf32>
    %29 = arith.subf %27, %28 : vector<8x1xf32>
    %cst_14 = arith.constant 0.000000e+00 : f32
    %30 = vector.broadcast %cst_14 : f32 to vector<8x1xf32>
    %31 = arith.maximumf %29, %30 : vector<8x1xf32>
    %cst_15 = arith.constant 9.99999974E-6 : f32
    %32 = vector.broadcast %cst_15 : f32 to vector<8x1xf32>
    %33 = arith.addf %31, %32 : vector<8x1xf32>
    %34 = math.rsqrt %33 : vector<8x1xf32>
    %35 = vector.extract_strided_slice %4 {offsets = [1, 0], sizes = [1, 128], strides = [1, 1]} : vector<3x128xf32> to vector<1x128xf32>
    %36 = vector.shape_cast %35 : vector<1x128xf32> to vector<128xf32>
    %37 = vector.shape_cast %36 : vector<128xf32> to vector<1x128xf32>
    %38 = vector.broadcast %34 : vector<8x1xf32> to vector<8x128xf32>
    %39 = vector.broadcast %37 : vector<1x128xf32> to vector<8x128xf32>
    %40 = arith.mulf %38, %39 : vector<8x128xf32>
    %41 = vector.extract_strided_slice %4 {offsets = [2, 0], sizes = [1, 128], strides = [1, 1]} : vector<3x128xf32> to vector<1x128xf32>
    %42 = vector.shape_cast %41 : vector<1x128xf32> to vector<128xf32>
    %43 = vector.broadcast %22 : vector<8x1xf32> to vector<8x128xf32>
    %44 = arith.mulf %43, %40 : vector<8x128xf32>
    %45 = vector.shape_cast %42 : vector<128xf32> to vector<1x128xf32>
    %46 = vector.broadcast %45 : vector<1x128xf32> to vector<8x128xf32>
    %47 = arith.subf %46, %44 : vector<8x128xf32>
    %48 = arith.mulf %18, %40 : vector<8x128xf32>
    %49 = arith.addf %48, %47 : vector<8x128xf32>
    %c0_16 = arith.constant 0 : index
    %c0_17 = arith.constant 0 : index
    %50 = vector.load %arg5[%c0_16, %c0_17] : memref<8x128xf32, #tpu.memory_space<vmem>>, vector<8x128xf32>
    tpu.vector_store %arg5[%c0_16, %c0_17], %49 {strides = array<i32>} : memref<8x128xf32, #tpu.memory_space<vmem>>, vector<8x128xf32>,
    return
  }
  func.func @transform_0(%arg0: i32, %arg1: memref<2xi32, #tpu.memory_space<smem>>) -> (i32, i32) {
    %c0_i32 = arith.constant 0 : i32
    %c0_i32_0 = arith.constant 0 : i32
    return %arg0, %c0_i32 : i32, i32
  }
  func.func @transform_1(%arg0: i32, %arg1: memref<2xi32, #tpu.memory_space<smem>>) -> (i32, i32, i32) {
    %0 = arith.index_cast %arg0 : i32 to index
    %1 = memref.load %arg1[%0] : memref<2xi32, #tpu.memory_space<smem>>
    %c0_i32 = arith.constant 0 : i32
    %c0_i32_0 = arith.constant 0 : i32
    %c0_i32_1 = arith.constant 0 : i32
    return %1, %c0_i32, %c0_i32_0 : i32, i32, i32
  }
  func.func @transform_2(%arg0: i32, %arg1: memref<2xi32, #tpu.memory_space<smem>>) -> (i32, i32, i32) {
    %0 = arith.index_cast %arg0 : i32 to index
    %1 = memref.load %arg1[%0] : memref<2xi32, #tpu.memory_space<smem>>
    %c0_i32 = arith.constant 0 : i32
    %c0_i32_0 = arith.constant 0 : i32
    %c0_i32_1 = arith.constant 0 : i32
    return %1, %c0_i32, %c0_i32_0 : i32, i32, i32
  }
  func.func @transform_3(%arg0: i32, %arg1: memref<2xi32, #tpu.memory_space<smem>>) -> (i32, i32) {
    %c0_i32 = arith.constant 0 : i32
    %c0_i32_0 = arith.constant 0 : i32
    return %arg0, %c0_i32 : i32, i32
  }
}

</mosaic_0001>

<llo_original>
// kernel: tpu_custom_call.1
$region0: #{tpu_custom_call.1}
  #allocation0 [shape = 'u32[]', space=smem, size = 0x4, offset = 0x4, fixed_abs, tag = 'smem constant byte address 0x4 - core index']
  #allocation1 [shape = 'u32[144,128]{1,0:T(1,128)}', space=vmem, size = 0x12000, scoped, tag = 'internal scratch']
  #allocation2 [shape = 's32[1]{0}', space=sflag, size = 0x4, scoped, tag = 'scoped memory for tpu_custom_call.1']
  #allocation3 [shape = 'u8[512]{0}', space=smem, size = 0x200, scoped, tag = 'prefetched SMEM operand 0']
  %s0 = inlined_call_operand.vmem [shape: s32[2], index: 0, kind: input, shape index: {}]
  %s1 = inlined_call_operand.vmem [shape: f32[16,24], index: 1, kind: input, shape index: {}]
  %s2 = inlined_call_operand.hbm [shape: f32[2,24,128], index: 2, kind: input, shape index: {}]
  %s3 = inlined_call_operand.vmem [shape: f32[2,3,128], index: 3, kind: input, shape index: {}]
  %s4 = inlined_call_operand.hbm [shape: f32[16,128], index: 4, kind: output, shape index: {}]
  %s5 = sld [smem:[#allocation0]]
  $region49: #{tpu_custom_call.1} parent=0
    _
  %s7 = ssub.s32 1, %s5
  %s8 = scalar_select 0, %s7, %s5
  %s9 = sshll.u32 %s0, 4
  %s10 = int_to_ptr.vmem [resolvable:$true] %s9
  %12 = dma.vmem_to_smem %s10, 16, [#allocation3], [#allocation2]
  %13 = dma.done [#allocation2], 16
  %14 = sfence
  $region1: #{tpu_custom_call.1} parent=0
    #allocation4 [shape = 'u8[24576]{0}', space=vmem, size = 0x6000, scoped, tag = 'input window, operand 2']
    #allocation5 [shape = 's32[2]{0}', space=sflag, size = 0x8, scoped, tag = 'scoped memory for tpu_custom_call.1']
    #allocation6 [shape = 's32[2]{0}', space=sflag, size = 0x8, scoped, tag = 'scoped memory for tpu_custom_call.1']
    #allocation7 [shape = 'u8[8192]{0}', space=vmem, size = 0x2000, scoped, tag = 'output window, operand 0']
    %15 = vsyncpa [#allocation5], 0
    %s16 = scalar_lea.sflag [#allocation5], 1
    %17 = vsyncpa %s16, 0
    %18 = vsyncpa [#allocation6], 0
    %s19 = scalar_lea.sflag [#allocation6], 1
    %20 = vsyncpa %s19, 0
    loop: start=0, step=1, limit=4
    $region2: #{tpu_custom_call.1} parent=1 // loop_pre_header
      _
    $region3: #{tpu_custom_call.1} parent=1 // loop_header
      %s22 = sphi 0, %s26
      %p23 = scmp.ge.s32.totalorder %s22, 4
      %s32 = sphi 0, %s34
      %s35 = sphi 0, %s32
      %s36 = sphi 0, %s35
      %s52 = sphi 0, %s36
      %s60 = sphi 0, %s62
      %s63 = sphi 0, %s60
      %s64 = sphi 0, %s63
      %s80 = sphi 0, %s64
      %s88 = sphi 0, %s90
      %s91 = sphi 0, %s88
      %s92 = sphi 0, %s91
      %s108 = sphi 0, %s92
      %s114 = sphi 0, %s116
      %s117 = sphi 0, %s114
      %s118 = sphi 0, %s117
      %s134 = sphi 0, %s118
    $region4: #{tpu_custom_call.1} parent=1 // loop_header_branch
      %25 = sbr.rel (%p23) target = $region8
    $region5: #{tpu_custom_call.1} parent=1 // loop_body
      %s27 = ssub.s32 %s22, 1
      %s28 = ssub.s32 %s22, 2
      %s29 = sadd.s32 %s22, 1
      %s30 = ssub.s32 %s22, %s29
      %p31 = scmp.eq.s32.totalorder %s30, 0
      %s33 = sadd.s32 %s32, 1
      %s34 = scalar_select %p31, %s32, %s33
      %p37 = pneg %p31
      %p38 = scmp.eq.s32.totalorder %s22, 1
      %p39 = por %p37, %p38
      %p40 = scmp.ne.s32.totalorder %s32, %s35
      %p41 = scmp.eq.s32.totalorder %s22, 0
      %p42 = por %p40, %p41
      %p43 = scmp.ne.s32.totalorder %s32, %s35
      %p44 = scmp.eq.s32.totalorder %s27, 1
      %p45 = por %p43, %p44
      %p46 = scmp.ne.s32.totalorder %s35, %s36
      %p47 = scmp.eq.s32.totalorder %s27, 0
      %p48 = por %p46, %p47
      %p49 = scmp.ne.s32.totalorder %s35, %s36
      %p50 = scmp.eq.s32.totalorder %s28, 1
      %p51 = por %p49, %p50
      %p53 = scmp.ne.s32.totalorder %s36, %s52
      %p54 = scmp.eq.s32.totalorder %s28, 0
      %p55 = por %p53, %p54
      %s56 = sld [smem:[#allocation3 + %s22]]
      %s57 = sld [smem:[#allocation3 + %s29]]
      %s58 = ssub.s32 %s56, %s57
      %p59 = scmp.eq.s32.totalorder %s58, 0
      %s61 = sadd.s32 %s60, 1
      %s62 = scalar_select %p59, %s60, %s61
      %p65 = pneg %p59
      %p66 = scmp.eq.s32.totalorder %s22, 1
      %p67 = por %p65, %p66
      %p68 = scmp.ne.s32.totalorder %s60, %s63
      %p69 = scmp.eq.s32.totalorder %s22, 0
      %p70 = por %p68, %p69
      %p71 = scmp.ne.s32.totalorder %s60, %s63
      %p72 = scmp.eq.s32.totalorder %s27, 1
      %p73 = por %p71, %p72
      %p74 = scmp.ne.s32.totalorder %s63, %s64
      %p75 = scmp.eq.s32.totalorder %s27, 0
      %p76 = por %p74, %p75
      %p77 = scmp.ne.s32.totalorder %s63, %s64
      %p78 = scmp.eq.s32.totalorder %s28, 1
      %p79 = por %p77, %p78
      %p81 = scmp.ne.s32.totalorder %s64, %s80
      %p82 = scmp.eq.s32.totalorder %s28, 0
      %p83 = por %p81, %p82
      %s84 = sld [smem:[#allocation3 + %s22]]
      %s85 = sld [smem:[#allocation3 + %s29]]
      %s86 = ssub.s32 %s84, %s85
      %p87 = scmp.eq.s32.totalorder %s86, 0
      %s89 = sadd.s32 %s88, 1
      %s90 = scalar_select %p87, %s88, %s89
      %p93 = pneg %p87
      %p94 = scmp.eq.s32.totalorder %s22, 1
      %p95 = por %p93, %p94
      %p96 = scmp.ne.s32.totalorder %s88, %s91
      %p97 = scmp.eq.s32.totalorder %s22, 0
      %p98 = por %p96, %p97
      %p99 = scmp.ne.s32.totalorder %s88, %s91
      %p100 = scmp.eq.s32.totalorder %s27, 1
      %p101 = por %p99, %p100
      %p102 = scmp.ne.s32.totalorder %s91, %s92
      %p103 = scmp.eq.s32.totalorder %s27, 0
      %p104 = por %p102, %p103
      %p105 = scmp.ne.s32.totalorder %s91, %s92
      %p106 = scmp.eq.s32.totalorder %s28, 1
      %p107 = por %p105, %p106
      %p109 = scmp.ne.s32.totalorder %s92, %s108
      %p110 = scmp.eq.s32.totalorder %s28, 0
      %p111 = por %p109, %p110
      %s112 = ssub.s32 %s22, %s29
      %p113 = scmp.eq.s32.totalorder %s112, 0
      %s115 = sadd.s32 %s114, 1
      %s116 = scalar_select %p113, %s114, %s115
      %p119 = pneg %p113
      %p120 = scmp.eq.s32.totalorder %s22, 1
      %p121 = por %p119, %p120
      %p122 = scmp.ne.s32.totalorder %s114, %s117
      %p123 = scmp.eq.s32.totalorder %s22, 0
      %p124 = por %p122, %p123
      %p125 = scmp.ne.s32.totalorder %s114, %s117
      %p126 = scmp.eq.s32.totalorder %s27, 1
      %p127 = por %p125, %p126
      %p128 = scmp.ne.s32.totalorder %s117, %s118
      %p129 = scmp.eq.s32.totalorder %s27, 0
      %p130 = por %p128, %p129
      %p131 = scmp.ne.s32.totalorder %s117, %s118
      %p132 = scmp.eq.s32.totalorder %s28, 1
      %p133 = por %p131, %p132
      %p135 = scmp.ne.s32.totalorder %s118, %s134
      %p136 = scmp.eq.s32.totalorder %s28, 0
      %p137 = por %p135, %p136
      %p138 = scmp.le.s32.totalorder 1, %s22
      %p139 = scmp.lt.s32.totalorder %s22, 3
      %p140 = pnand %p138, %p139
      %p141 = pneg %p140
      // Predicated region
      $region9: #{tpu_custom_call.1} parent=5 // pred_check
        _
      $region10: #{tpu_custom_call.1} parent=5 // pred_check_branch
        %143 = sbr.rel (%p140) target = $region12
      $region11: #{tpu_custom_call.1} parent=5 // pred_region
        %s144 = ssub.s32 %s22, 1
      $region12: #{tpu_custom_call.1} parent=5 // pred_fallthru
        _
      %p145 = scmp.lt.s32.totalorder %s22, 2
      // Predicated region
      $region13: #{tpu_custom_call.1} parent=5 // pred_check
        %p146 = pneg %p145
      $region14: #{tpu_custom_call.1} parent=5 // pred_check_branch
        %148 = sbr.rel (%p146) target = $region16
      $region15: #{tpu_custom_call.1} parent=5 // pred_region
        // Predicated region
        $region17: #{tpu_custom_call.1} parent=15 // pred_check
          %p149 = pneg %p42
        $region18: #{tpu_custom_call.1} parent=15 // pred_check_branch
          %151 = sbr.rel (%p149) target = $region20
        $region19: #{tpu_custom_call.1} parent=15 // pred_region
          %p152 = scmp.lt.s32.totalorder %s22, 1
          %s153 = scalar_select %p152, %s22, 1
          %s154 = smul.addr %s153, 8
          %s155 = scalar_lea.vmem %s1, %s154
        $region20: #{tpu_custom_call.1} parent=15 // pred_fallthru
          _
        // Predicated region
        $region21: #{tpu_custom_call.1} parent=15 // pred_check
          %p156 = pneg %p70
        $region22: #{tpu_custom_call.1} parent=15 // pred_check_branch
          %158 = sbr.rel (%p156) target = $region24
        $region23: #{tpu_custom_call.1} parent=15 // pred_region
          %s159 = sand.u32 %s60, 1
          %s160 = scalar_lea.sflag [#allocation5], %s159
          %s161 = sand.u32 %s60, 1
          %s162 = smul.addr %s161, 24
          %s163 = scalar_lea.vmem [#allocation4], %s162
          %s164 = sld [smem:[#allocation3 + %s22]]
          %s166 = ssub.s32 384, 384
          %167 = vsyncadd %s160, %s166
          %s168 = smul.addr %s164, 3
          %s169 = smul.addr %s168, 128
          %s170 = scalar_lea.hbm %s2, %s169
          %s171 = sshll.u32 %s163, 4
          %s172 = int_to_ptr.vmem [resolvable:$true] %s171
          %177 = dma.hbm_to_vmem [thread:$0]  %s170, 384, %s172, %s160, 128, 128, 8
        $region24: #{tpu_custom_call.1} parent=15 // pred_fallthru
          _
        // Predicated region
        $region25: #{tpu_custom_call.1} parent=15 // pred_check
          %p178 = pneg %p98
        $region26: #{tpu_custom_call.1} parent=15 // pred_check_branch
          %180 = sbr.rel (%p178) target = $region28
        $region27: #{tpu_custom_call.1} parent=15 // pred_region
          %s181 = sld [smem:[#allocation3 + %s22]]
          %p182 = scmp.lt.s32.totalorder %s181, 1
          %s183 = scalar_select %p182, %s181, 1
          %s184 = smul.addr %s183, 4
          %s185 = scalar_lea.vmem %s3, %s184
          %s186 = sld [smem:[#allocation3 + %s22]]
        $region28: #{tpu_custom_call.1} parent=15 // pred_fallthru
          _
      $region16: #{tpu_custom_call.1} parent=5 // pred_fallthru
        _
      %p187 = scmp.le.s32.totalorder 1, %s22
      %p188 = scmp.lt.s32.totalorder %s22, 3
      %p189 = pnand %p187, %p188
      %p190 = pneg %p189
      // Predicated region
      $region29: #{tpu_custom_call.1} parent=5 // pred_check
        _
      $region30: #{tpu_custom_call.1} parent=5 // pred_check_branch
        %192 = sbr.rel (%p189) target = $region32
      $region31: #{tpu_custom_call.1} parent=5 // pred_region
        %s193 = ssub.s32 %s22, 1
        %s194 = sand.u32 %s63, 1
        %s195 = scalar_lea.sflag [#allocation5], %s194
        %s196 = sand.u32 %s63, 1
        %s197 = smul.addr %s196, 24
        %s198 = scalar_lea.vmem [#allocation4], %s197
        // Predicated region
        $region33: #{tpu_custom_call.1} parent=31 // pred_check
          %p199 = pneg %p76
        $region34: #{tpu_custom_call.1} parent=31 // pred_check_branch
          %201 = sbr.rel (%p199) target = $region36
        $region35: #{tpu_custom_call.1} parent=31 // pred_region
          %202 = dma.done %s195, 384
        $region36: #{tpu_custom_call.1} parent=31 // pred_fallthru
          _
        %p203 = scmp.lt.s32.totalorder %s27, 1
        %s204 = scalar_select %p203, %s27, 1
        %s205 = smul.addr %s204, 8
        %s206 = scalar_lea.vmem %s1, %s205
        %p207 = pneg %p48
        %p208 = pneg %p45
        %s209 = sand.u32 %s63, 1
        %s210 = scalar_lea.sflag [#allocation5], %s209
        %s211 = sand.u32 %s63, 1
        %s212 = smul.addr %s211, 24
        %s213 = scalar_lea.vmem [#allocation4], %s212
        %p214 = pneg %p76
        %p215 = pneg %p73
        %s216 = sld [smem:[#allocation3 + %s27]]
        %p217 = scmp.lt.s32.totalorder %s216, 1
        %s218 = scalar_select %p217, %s216, 1
        %s219 = smul.addr %s218, 4
        %s220 = scalar_lea.vmem %s3, %s219
        %p221 = pneg %p104
        %p222 = pneg %p101
        %p223 = pneg %p130
        %p224 = pneg %p127
        %s225 = sand.u32 %s117, 1
        %s226 = scalar_lea.sflag [#allocation6], %s225
        %s227 = sand.u32 %s117, 1
        %s228 = smul.addr %s227, 8
        %s229 = scalar_lea.vmem [#allocation7], %s228
        %p230 = scmp.lt.s32.totalorder %s27, 1
        %s231 = scalar_select %p230, %s27, 1
        %s232 = smul.addr %s231, 8
        %s233 = scalar_lea.vmem %s1, %s232
        %s234 = sld [smem:[#allocation3 + %s27]]
        %s235 = sld [smem:[#allocation3 + %s27]]
        %p236 = scmp.lt.s32.totalorder %s235, 1
        %s237 = scalar_select %p236, %s235, 1
        %s238 = smul.addr %s237, 4
        %s239 = scalar_lea.vmem %s3, %s238
        %s240 = sld [smem:[#allocation3 + %s27]]
        %v241 = vld [vmem:[%s233] sm:$0xff]
        %v242 = vld [vmem:[%s198] sm:$0xff]
        %v243 = vld [vmem:[%s198 + $0x8] sm:$0xff]
        %v244 = vld [vmem:[%s198 + $0x10] sm:$0xff]
        %v245 = vld [vmem:[%s239] sm:$0x7]
        %v246 = vlaneseq
        %v247 = vshrl.u32 %v246, 7
        %v248 = vsub.s32 0, %v247
        %v249 = vrot.slane %v245, %v248
        %vm250 = vcmask 195584
        %v252 = vsel %vm250, %v241, 0
        %254 = vmatprep.subr.mxu0 0.0
        %255 = vmatpush1.msra.mxu0 %v242
        %256 = vmatprep.subr.mxu0 0.0
        %257 = vmatpush1.msra.mxu0 %v243
        %258 = vmatprep.subr.mxu0 0.0
        %259 = vmatpush1.msra.mxu0 %v244
        %260 = vmatprep.subr.mxu0 0.0
        %261 = vmatpush1.msra.mxu0 0.0
        %262 = vmatprep.subr.mxu0 0.0
        %263 = vmatpush1.msra.mxu0 0.0
        %264 = vmatprep.subr.mxu0 0.0
        %265 = vmatpush1.msra.mxu0 0.0
        %266 = vmatprep.subr.mxu0 0.0
        %267 = vmatpush1.msra.mxu0 0.0
        %268 = vmatprep.subr.mxu0 0.0
        %269 = vmatpush1.msra.mxu0 0.0
        %270 = vmatprep.subr.mxu0 0.0
        %271 = vmatpush1.msra.mxu0 0.0
        %272 = vmatprep.subr.mxu0 0.0
        %273 = vmatpush1.msra.mxu0 0.0
        %274 = vmatprep.subr.mxu0 0.0
        %275 = vmatpush1.msra.mxu0 0.0
        %276 = vmatprep.subr.mxu0 0.0
        %277 = vmatpush1.msra.mxu0 0.0
        %278 = vmatprep.subr.mxu0 0.0
        %279 = vmatpush1.msra.mxu0 0.0
        %280 = vmatprep.subr.mxu0 0.0
        %281 = vmatpush1.msra.mxu0 0.0
        %282 = vmatprep.subr.mxu0 0.0
        %283 = vmatpush1.msra.mxu0 0.0
        %284 = vmatprep.subr.mxu0 0.0
        %285 = vmatpush1.msra.mxu0 0.0
        %286 = vmatprep.subr.mxu0 0.0
        %287 = vmatpush1.msra.mxu0 0.0
        %288 = vmatprep.subr.mxu0 0.0
        %289 = vmatpush1.msra.mxu0 0.0
        %290 = vmatprep.subr.mxu0 0.0
        %291 = vmatpush1.msra.mxu0 0.0
        %292 = vmatprep.subr.mxu0 0.0
        %293 = vmatpush1.msra.mxu0 0.0
        %294 = vmatprep.subr.mxu0 0.0
        %295 = vmatpush1.msra.mxu0 0.0
        %296 = vmatprep.subr.mxu0 0.0
        %297 = vmatpush1.msra.mxu0 0.0
        %298 = vmatprep.subr.mxu0 0.0
        %299 = vmatpush1.msra.mxu0 0.0
        %300 = vmatprep.subr.mxu0 0.0
        %301 = vmatpush1.msra.mxu0 0.0
        %302 = vmatprep.subr.mxu0 0.0
        %303 = vmatpush1.msra.mxu0 0.0
        %304 = vmatprep.subr.mxu0 0.0
        %305 = vmatpush1.msra.mxu0 0.0
        %306 = vmatprep.subr.mxu0 0.0
        %307 = vmatpush1.msra.mxu0 0.0
        %308 = vmatprep.subr.mxu0 0.0
        %309 = vmatpush1.msra.mxu0 0.0
        %310 = vmatprep.subr.mxu0 0.0
        %311 = vmatpush1.msra.mxu0 0.0
        %312 = vmatprep.subr.mxu0 0.0
        %313 = vmatpush1.msra.mxu0 0.0
        %314 = vmatprep.subr.mxu0 0.0
        %315 = vmatpush1.msra.mxu0 0.0
        %316 = vmatprep.subr.mxu0 0.0
        %317 = vmatpush1.msra.mxu0 0.0
        %318 = vmatprep.mubr.f32.mxu0 0.0
        %319 = vmatmul.mubr.f32.gmra.mrb[0].mxu0 %v252
        %v320 = vpop.f32.mrb[0].mxu0
        %v321 = vadd.f32 %v249, %v320
        %v322 = vpop.f32.mrb[0].mxu0
        %323 = vdwg.mxu0
        %v324 = vmul.f32 %v321, 0.5
        %v325 = vmul.f32 %v321, 0.70710677
        %v326 = verf.f32.pop %v325
        %v327 = vadd.f32 %v326, 1.0
        %v328 = vmul.f32 %v324, %v327
        %329 = vadd.xlane.f32.xlu0 %v328
        %v330 = vpop.xlane.xlu0 %329
        %v331 = vmul.f32 %v330, 0.03125
        %v332 = vmul.f32 %v328, %v328
        %333 = vadd.xlane.f32.xlu0 %v332
        %v334 = vpop.xlane.xlu0 %333
        %v335 = vmul.f32 %v334, 0.03125
        %v336 = vmul.f32 %v331, %v331
        %v337 = vsub.f32 %v335, %v336
        %v338 = vmax.f32 %v337, 0.0
        %v339 = vadd.f32 %v338, 1e-05
        %v340 = vrsqrt.pop %v339
        %v341 = vlaneseq
        %v342 = vshrl.u32 %v341, 7
        %v343 = vsub.s32 1, %v342
        %v344 = vrot.slane %v245, %v343
        %v345 = vmul.f32 %v340, %v344
        %v346 = vmul.f32 %v331, %v345
        %v347 = vlaneseq
        %v348 = vshrl.u32 %v347, 7
        %v349 = vsub.s32 2, %v348
        %v350 = vrot.slane %v245, %v349
        %v351 = vsub.f32 %v350, %v346
        %v352 = vmul.f32 %v328, %v345
        %v353 = vadd.f32 %v352, %v351
        %354 = vst [vmem:[%s229] sm:$0xff] %v353
        %s355 = sand.u32 %s117, 1
        %s356 = scalar_lea.sflag [#allocation6], %s355
        %s357 = sand.u32 %s117, 1
        %s358 = smul.addr %s357, 8
        %s359 = scalar_lea.vmem [#allocation7], %s358
        // Predicated region
        $region37: #{tpu_custom_call.1} parent=31 // pred_check
          %p360 = pneg %p127
        $region38: #{tpu_custom_call.1} parent=31 // pred_check_branch
          %362 = sbr.rel (%p360) target = $region40
        $region39: #{tpu_custom_call.1} parent=31 // pred_region
          %s364 = ssub.s32 128, 128
          %365 = vsyncadd %s356, %s364
          %s366 = smul.addr %s27, 128
          %s367 = scalar_lea.hbm %s4, %s366
          %s369 = sshll.u32 %s359, 4
          %s370 = int_to_ptr.vmem [resolvable:$true] %s369
          %372 = dma.vmem_to_hbm [thread:$0]  %s370, 128, %s367, %s356
        $region40: #{tpu_custom_call.1} parent=31 // pred_fallthru
          _
      $region32: #{tpu_custom_call.1} parent=5 // pred_fallthru
        _
      %p373 = scmp.le.s32.totalorder 2, %s22
      // Predicated region
      $region41: #{tpu_custom_call.1} parent=5 // pred_check
        %p374 = pneg %p373
      $region42: #{tpu_custom_call.1} parent=5 // pred_check_branch
        %376 = sbr.rel (%p374) target = $region44
      $region43: #{tpu_custom_call.1} parent=5 // pred_region
        %s377 = ssub.s32 %s22, 2
        // Predicated region
        $region45: #{tpu_custom_call.1} parent=43 // pred_check
          %p378 = pneg %p133
        $region46: #{tpu_custom_call.1} parent=43 // pred_check_branch
          %380 = sbr.rel (%p378) target = $region48
        $region47: #{tpu_custom_call.1} parent=43 // pred_region
          %s381 = sand.u32 %s118, 1
          %s382 = scalar_lea.sflag [#allocation6], %s381
          %s383 = sand.u32 %s118, 1
          %s384 = smul.addr %s383, 8
          %s385 = scalar_lea.vmem [#allocation7], %s384
          %386 = dma.done %s382, 128
        $region48: #{tpu_custom_call.1} parent=43 // pred_fallthru
          _
      $region44: #{tpu_custom_call.1} parent=5 // pred_fallthru
        _
    $region6: #{tpu_custom_call.1} parent=1 // loop_footer
      %s26 = sadd.s32 1, %s22
    $region7: #{tpu_custom_call.1} parent=1 // loop_footer_branch
      %21 = sbr.rel target = $region3
    $region8: #{tpu_custom_call.1} parent=1 // loop_exit
      _
    %387 = vsyncpa [#allocation5], 1
    %s388 = scalar_lea.sflag [#allocation5], 1
    %389 = vsyncpa %s388, 1
    %390 = vsyncpa [#allocation6], 1
    %s391 = scalar_lea.sflag [#allocation6], 1
    %392 = vsyncpa %s391, 1

</llo_original>
